<compile_context>
chip_gen: v6e
topology: v6e:2x2x1
jax: 0.10.0
libtpu: 0.0.40
codegen_flags: <defaults>
</compile_context>

<pallas_src>
import functools

import jax
import jax.numpy as jnp
from jax import lax
from jax.experimental import pallas as pl
from jax.experimental.pallas import tpu as pltpu


# ----------------------------------------------------------------------------
# normalize2mom constant for SiLU (e3nn rescales the gate so its second moment
# under N(0,1) is 1).
# ----------------------------------------------------------------------------
def _silu_f32(h):
    return h * (1.0 / (1.0 + jnp.exp(-h)))


def _normalize2mom_const(act, lim=8.0, n=20001):
    """1 / sqrt(E_{z~N(0,1)}[act(z)^2]) via trapezoid quadrature."""
    z = jnp.linspace(-lim, lim, n)
    pdf = jnp.exp(-0.5 * z * z) / jnp.sqrt(2.0 * jnp.pi)
    f2 = act(z) ** 2 * pdf
    dz = z[1] - z[0]
    m2 = jnp.sum((f2[:-1] + f2[1:]) * 0.5 * dz)
    return float(1.0 / jnp.sqrt(m2))


_SILU_MOM_SCALE = _normalize2mom_const(_silu_f32)   # ~1.679 for SiLU


# ----------------------------------------------------------------------------
# Kernel
# ----------------------------------------------------------------------------
def _energy_layer_kernel(x_ref, w_ref, o_ref, *, inv_sqrt_fan_in, act_scale):
    # One row-tile of nodes per grid step; the (bf16) weight is resident.
    # bf16 x bf16 MXU matmul, f32 accumulation.
    h = jnp.dot(x_ref[...], w_ref[...], preferred_element_type=jnp.float32)
    # e3nn o3.Linear path normalization: 1/sqrt(fan_in).  Free VPU multiply.
    h = h * inv_sqrt_fan_in
    # SiLU gate, all in f32.  Reciprocal goes to the EUP slot (approx=True).
    sig = pl.reciprocal(1.0 + jnp.exp(-h), approx=True)
    o_ref[...] = (act_scale * h * sig).astype(o_ref.dtype)


# ----------------------------------------------------------------------------
# Tiling heuristic
# ----------------------------------------------------------------------------
def _choose_tm(n, d_in, d_hid, *, tm_max, num_cores,
               x_bytes=2, w_bytes=2, o_bytes=4, vmem_budget=28 << 20):
    """Pick the row tile.

    Smallest step count that (a) keeps the tile <= tm_max, (b) is a multiple
    of num_cores so dimension_semantics=("parallel",) balances across
    TensorCores, and (c) fits double-buffered x/out tiles + the resident
    weight inside `vmem_budget` (guardrail for wider configs / v7x's 64 MiB
    VMEM).  16-row alignment for bf16 sublane packing.
    """
    tm_max = max(16, (int(tm_max) // 16) * 16)

    def fits(tm):
        need = 2 * tm * (d_in * x_bytes + d_hid * o_bytes) + 2 * d_in * d_hid * w_bytes
        return need <= vmem_budget

    while tm_max > 16 and not fits(tm_max):
        tm_max //= 2

    steps = max(num_cores, -(-n // tm_max))
    steps = -(-steps // num_cores) * num_cores       # round up to multiple of cores
    tm = -(-n // steps)
    tm = max(16, ((tm + 15) // 16) * 16)             # bf16 packs 2 rows / sublane
    return tm


def _detect_num_tensorcores():
    """Best-effort TC count (2 on v7x, 1 on v5e/v6e). Falls back to 1."""
    try:
        return max(1, int(getattr(jax.devices()[0], "num_cores", 1)))
    except Exception:  # noqa: BLE001
        return 1


# ----------------------------------------------------------------------------
# Wrapper
# ----------------------------------------------------------------------------
@functools.partial(jax.jit, static_argnames=("tm_max", "num_cores"))
def energy_layer_forward(x, w, *, tm_max=2048, num_cores=1):
    """x: [N, D_IN] f32, w: [D_IN, D_HID] f32 -> [N, D_HID] f32 (same as x)."""
    n, d_in = x.shape
    d_hid = w.shape[1]
    out_dtype = x.dtype

    # bf16 at the kernel boundary halves the dominant HBM read traffic.  In a
    # full model the producer emits bf16 and these casts fuse away.
    x_bf = x.astype(jnp.bfloat16)
    w_bf = w.astype(jnp.bfloat16)

    tm = _choose_tm(n, d_in, d_hid, tm_max=tm_max, num_cores=num_cores,
                    x_bytes=2, w_bytes=2, o_bytes=jnp.dtype(out_dtype).itemsize)
    grid = (pl.cdiv(n, tm),)

    kernel = functools.partial(
        _energy_layer_kernel,
        inv_sqrt_fan_in=1.0 / float(d_in) ** 0.5,
        act_scale=_SILU_MOM_SCALE)

    cost = pl.CostEstimate(
        flops=2 * n * d_in * d_hid,
        transcendentals=2 * n * d_hid,                       # exp + reciprocal
        bytes_accessed=n * d_in * 2 + d_in * d_hid * 2
        + n * d_hid * jnp.dtype(out_dtype).itemsize)

    return pl.pallas_call(
        kernel,
        out_shape=jax.ShapeDtypeStruct((n, d_hid), out_dtype),
        grid=grid,
        in_specs=[
            pl.BlockSpec((tm, d_in), lambda i: (i, 0)),       # row tile of x
            pl.BlockSpec((d_in, d_hid), lambda i: (0, 0)),    # resident weight
        ],
        out_specs=pl.BlockSpec((tm, d_hid), lambda i: (i, 0)),
        compiler_params=pltpu.CompilerParams(
            dimension_semantics=("parallel",)),
        cost_estimate=cost,
    )(x_bf, w_bf)


# ----------------------------------------------------------------------------
# References
# ----------------------------------------------------------------------------
def _reference_bf16(x, w):
    """Same numerics as the kernel (bf16 inputs, f32 accumulation)."""
    d_in = x.shape[1]
    h = jnp.dot(x.astype(jnp.bfloat16), w.astype(jnp.bfloat16),
                preferred_element_type=jnp.float32) * (1.0 / float(d_in) ** 0.5)
    return (_SILU_MOM_SCALE * _silu_f32(h)).astype(x.dtype)


def _reference_f32(x, w):
    """Full-precision reference of the PyTorch module's math."""
    d_in = x.shape[1]
    h = jnp.dot(x, w, precision=lax.Precision.HIGHEST) * (1.0 / float(d_in) ** 0.5)
    return _SILU_MOM_SCALE * _silu_f32(h)


# ----------------------------------------------------------------------------
# Self-test
# ----------------------------------------------------------------------------
if __name__ == "__main__":
    key = jax.random.PRNGKey(0)
    k_x, k_w = jax.random.split(key, 2)

    # Small example consistent with the module: irreps_in='128x0e',
    # MLP_irreps='128x0e', gate=SiLU.  N deliberately NOT a multiple of the
    # row tile to exercise ragged-tail masking (no pad/slice in the wrapper).
    N, D_IN, D_HID = 73, 128, 128
    x = jax.random.normal(k_x, (N, D_IN), dtype=jnp.float32)
    w = jax.random.normal(k_w, (D_IN, D_HID), dtype=jnp.float32)

    num_cores = _detect_num_tensorcores()

    # Default tiling: single (or per-core) large row tile.
    out = jax.block_until_ready(energy_layer_forward(x, w, num_cores=num_cores))
    # Tiny tile: 3 grid steps with a masked ragged last block (pipeline path).
    out_multi = jax.block_until_ready(
        energy_layer_forward(x, w, tm_max=32, num_cores=1))

    ref_b = _reference_bf16(x, w)   # numerics-matched reference
    ref_f = _reference_f32(x, w)    # full f32 reference (bf16 rounding drift)

    assert out.shape == (N, D_HID), out.shape
    assert jnp.allclose(out, ref_b, rtol=1e-2, atol=1e-2), "mismatch vs bf16 reference"
    assert jnp.allclose(out, ref_f, rtol=5e-2, atol=5e-2), "mismatch vs f32 reference"
    assert jnp.allclose(out_multi, out, rtol=1e-5, atol=1e-5), "tiling changed result"

    print("KERNEL_OK")
</pallas_src>

<mosaic_0001>
module attributes {stable_mosaic.version = 11 : i64} {
  func.func @_energy_layer_kernel(%arg0: i32, %arg1: memref<80x128xbf16, #tpu.memory_space<vmem>>, %arg2: memref<128x128xbf16, #tpu.memory_space<vmem>>, %arg3: memref<80x128xf32, #tpu.memory_space<vmem>>) attributes {dimension_semantics = [#tpu.dimension_semantics<parallel>], iteration_bounds = array<i64: 1>, scalar_prefetch = 0 : i64, scratch_operands = 0 : i64, tpu.core_type = #tpu.core_type<tc>, window_params = [{transform_indices = @transform_0, window_bounds = array<i64: 80, 128>}, {pipeline_mode = #tpu.pipeline_mode<synchronous>, transform_indices = @transform_1, window_bounds = array<i64: 128, 128>}, {transform_indices = @transform_2, window_bounds = array<i64: 80, 128>}]} {
    %c0 = arith.constant 0 : index
    %c0_0 = arith.constant 0 : index
    %0 = vector.load %arg1[%c0, %c0_0] : memref<80x128xbf16, #tpu.memory_space<vmem>>, vector<80x128xbf16>
    %c0_1 = arith.constant 0 : index
    %c0_2 = arith.constant 0 : index
    %1 = vector.load %arg2[%c0_1, %c0_2] : memref<128x128xbf16, #tpu.memory_space<vmem>>, vector<128x128xbf16>
    %cst = arith.constant dense<0.000000e+00> : vector<80x128xf32>
    %2 = tpu.matmul %0, %1, %cst {dimension_numbers = #tpu.dot_dimension_numbers<[1], [0], [0], [1], [0, 0, 1, 1], [], []>} : vector<80x128xbf16>, vector<128x128xbf16>, vector<80x128xf32> -> vector<80x128xf32>
    %cst_3 = arith.constant 0.0883883461 : f32
    %3 = vector.broadcast %cst_3 : f32 to vector<80x128xf32>
    %4 = arith.mulf %2, %3 : vector<80x128xf32>
    %cst_4 = arith.constant 0.000000e+00 : f32
    %5 = vector.broadcast %cst_4 : f32 to vector<80x128xf32>
    %6 = arith.subf %5, %4 : vector<80x128xf32>
    %7 = math.exp %6 : vector<80x128xf32>
    %cst_5 = arith.constant 1.000000e+00 : f32
    %8 = vector.broadcast %cst_5 : f32 to vector<80x128xf32>
    %9 = arith.addf %8, %7 : vector<80x128xf32>
    %10 = tpu.reciprocal %9 {approx = true} : vector<80x128xf32> -> vector<80x128xf32>
    %cst_6 = arith.constant 1.67639339 : f32
    %11 = vector.broadcast %cst_6 : f32 to vector<80x128xf32>
    %12 = arith.mulf %11, %4 : vector<80x128xf32>
    %13 = arith.mulf %12, %10 : vector<80x128xf32>
    %c0_7 = arith.constant 0 : index
    %c0_8 = arith.constant 0 : index
    %14 = vector.load %arg3[%c0_7, %c0_8] : memref<80x128xf32, #tpu.memory_space<vmem>>, vector<80x128xf32>
    tpu.vector_store %arg3[%c0_7, %c0_8], %13 {strides = array<i32>} : memref<80x128xf32, #tpu.memory_space<vmem>>, vector<80x128xf32>,
    return
  }
  func.func @transform_0(%arg0: i32) -> (i32, i32) {
    %c0_i32 = arith.constant 0 : i32
    %c0_i32_0 = arith.constant 0 : i32
    return %arg0, %c0_i32 : i32, i32
  }
  func.func @transform_1(%arg0: i32) -> (i32, i32) {
    %c0_i32 = arith.constant 0 : i32
    %c0_i32_0 = arith.constant 0 : i32
    %c0_i32_1 = arith.constant 0 : i32
    return %c0_i32, %c0_i32_0 : i32, i32
  }
  func.func @transform_2(%arg0: i32) -> (i32, i32) {
    %c0_i32 = arith.constant 0 : i32
    %c0_i32_0 = arith.constant 0 : i32
    return %arg0, %c0_i32 : i32, i32
  }
}

</mosaic_0001>

<llo_original>
// kernel: energy_layer_forward.1
$region0: #{energy_layer_forward.1}
  #allocation0 [shape = 'u32[]', space=smem, size = 0x4, offset = 0x4, fixed_abs, tag = 'smem constant byte address 0x4 - core index']
  #allocation1 [shape = 'u32[144,128]{1,0:T(1,128)}', space=vmem, size = 0x12000, scoped, tag = 'internal scratch']
  %s0 = inlined_call_operand.vmem [shape: bf16[73,128], index: 0, kind: input, shape index: {}]
  %s1 = inlined_call_operand.vmem [shape: bf16[128,128], index: 1, kind: input, shape index: {}]
  %s2 = inlined_call_operand.hbm [shape: f32[73,128], index: 2, kind: output, shape index: {}]
  %s3 = sld [smem:[#allocation0]]
  $region18: #{energy_layer_forward.1} parent=0
    _
  %s5 = ssub.s32 1, %s3
  %s6 = scalar_select 0, %s5, %s3
  $region1: #{energy_layer_forward.1} parent=0
    #allocation2 [shape = 'u8[40960]{0}', space=vmem, size = 0xa000, scoped, tag = 'output window, operand 0, single buffered']
    #allocation3 [shape = 's32[1]{0}', space=sflag, size = 0x4, scoped, tag = 'scoped memory for energy_layer_forward.1']
    %7 = vsyncpa [#allocation3], 0
    // Predicated region
    $region2: #{energy_layer_forward.1} parent=1 // pred_check
      _
    $region3: #{energy_layer_forward.1} parent=1 // pred_check_branch
      %9 = sbr.rel (0) target = $region5
    $region4: #{energy_layer_forward.1} parent=1 // pred_region
      _
    $region5: #{energy_layer_forward.1} parent=1 // pred_fallthru
      _
    // Predicated region
    $region6: #{energy_layer_forward.1} parent=1 // pred_check
      _
    $region7: #{energy_layer_forward.1} parent=1 // pred_check_branch
      %11 = sbr.rel (0) target = $region9
    $region8: #{energy_layer_forward.1} parent=1 // pred_region
      _
    $region9: #{energy_layer_forward.1} parent=1 // pred_fallthru
      _
    %v13 = vld [vmem:[%s0] sm:$0xf]
    %v14 = vld [vmem:[%s0 + $0x4] sm:$0xf]
    %v15 = vld [vmem:[%s0 + $0x8] sm:$0xf]
    %v16 = vld [vmem:[%s0 + $0xc] sm:$0xf]
    %v17 = vld [vmem:[%s0 + $0x10] sm:$0xf]
    %v18 = vld [vmem:[%s0 + $0x14] sm:$0xf]
    %v19 = vld [vmem:[%s0 + $0x18] sm:$0xf]
    %v20 = vld [vmem:[%s0 + $0x1c] sm:$0xf]
    %v21 = vld [vmem:[%s0 + $0x20] sm:$0xf]
    %v22 = vld [vmem:[%s0 + $0x24] sm:$0xf]
    %v23 = vld [vmem:[%s1] sm:$0xf]
    %v24 = vld [vmem:[%s1 + $0x4] sm:$0xf]
    %v25 = vld [vmem:[%s1 + $0x8] sm:$0xf]
    %v26 = vld [vmem:[%s1 + $0xc] sm:$0xf]
    %v27 = vld [vmem:[%s1 + $0x10] sm:$0xf]
    %v28 = vld [vmem:[%s1 + $0x14] sm:$0xf]
    %v29 = vld [vmem:[%s1 + $0x18] sm:$0xf]
    %v30 = vld [vmem:[%s1 + $0x1c] sm:$0xf]
    %v31 = vld [vmem:[%s1 + $0x20] sm:$0xf]
    %v32 = vld [vmem:[%s1 + $0x24] sm:$0xf]
    %v33 = vld [vmem:[%s1 + $0x28] sm:$0xf]
    %v34 = vld [vmem:[%s1 + $0x2c] sm:$0xf]
    %v35 = vld [vmem:[%s1 + $0x30] sm:$0xf]
    %v36 = vld [vmem:[%s1 + $0x34] sm:$0xf]
    %v37 = vld [vmem:[%s1 + $0x38] sm:$0xf]
    %v38 = vld [vmem:[%s1 + $0x3c] sm:$0xf]
    %v49 = vunpack.c.l.b16 %v13
    %v50 = vunpack.c.l.b16 %v14
    %v51 = vunpack.c.l.b16 %v15
    %v52 = vunpack.c.l.b16 %v16
    %v53 = vunpack.c.l.b16 %v17
    %v54 = vunpack.c.l.b16 %v18
    %v55 = vunpack.c.l.b16 %v19
    %v56 = vunpack.c.l.b16 %v20
    %v57 = vunpack.c.l.b16 %v21
    %v58 = vunpack.c.l.b16 %v22
    %v59 = vpack.c.b16 %v50, %v49
    %v60 = vpack.c.b16 %v52, %v51
    %v61 = vpack.c.b16 %v54, %v53
    %v62 = vpack.c.b16 %v56, %v55
    %v63 = vpack.c.b16 %v58, %v57
    %v85 = vunpack.c.l.b16 %v23
    %v86 = vunpack.c.l.b16 %v24
    %v87 = vunpack.c.l.b16 %v25
    %v88 = vunpack.c.l.b16 %v26
    %v89 = vunpack.c.l.b16 %v27
    %v90 = vunpack.c.l.b16 %v28
    %v91 = vunpack.c.l.b16 %v29
    %v92 = vunpack.c.l.b16 %v30
    %v93 = vunpack.c.l.b16 %v31
    %v94 = vunpack.c.l.b16 %v32
    %v95 = vunpack.c.l.b16 %v33
    %v96 = vunpack.c.l.b16 %v34
    %v97 = vunpack.c.l.b16 %v35
    %v98 = vunpack.c.l.b16 %v36
    %v99 = vunpack.c.l.b16 %v37
    %v100 = vunpack.c.l.b16 %v38
    %v101 = vpack.c.b16 %v86, %v85
    %v102 = vpack.c.b16 %v88, %v87
    %v103 = vpack.c.b16 %v90, %v89
    %v104 = vpack.c.b16 %v92, %v91
    %v105 = vpack.c.b16 %v94, %v93
    %v106 = vpack.c.b16 %v96, %v95
    %v107 = vpack.c.b16 %v98, %v97
    %v108 = vpack.c.b16 %v100, %v99
    %117 = vmatprep.subr.bf16.mxu0 0
    %118 = vmatpush1.bf16.msra.mxu0 %v108
    %119 = vmatprep.subr.bf16.mxu0 0
    %120 = vmatpush1.bf16.msra.mxu0 %v107
    %121 = vmatprep.subr.bf16.mxu0 0
    %122 = vmatpush1.bf16.msra.mxu0 %v106
    %123 = vmatprep.subr.bf16.mxu0 0
    %124 = vmatpush1.bf16.msra.mxu0 %v105
    %125 = vmatprep.subr.bf16.mxu0 0
    %126 = vmatpush1.bf16.msra.mxu0 %v104
    %127 = vmatprep.subr.bf16.mxu0 0
    %128 = vmatpush1.bf16.msra.mxu0 %v103
    %129 = vmatprep.subr.bf16.mxu0 0
    %130 = vmatpush1.bf16.msra.mxu0 %v102
    %131 = vmatprep.subr.bf16.mxu0 0
    %132 = vmatpush1.bf16.msra.mxu0 %v101
    %133 = vmatprep.subr.bf16.mxu0 0
    %134 = vmatpush2.bf16.msra.mxu0 0
    %135 = vmatprep.subr.bf16.mxu0 0
    %136 = vmatpush2.bf16.msra.mxu0 0
    %137 = vmatprep.subr.bf16.mxu0 0
    %138 = vmatpush2.bf16.msra.mxu0 0
    %139 = vmatprep.subr.bf16.mxu0 0
    %140 = vmatpush2.bf16.msra.mxu0 0
    %141 = vmatprep.subr.bf16.mxu0 0
    %142 = vmatpush2.bf16.msra.mxu0 0
    %143 = vmatprep.subr.bf16.mxu0 0
    %144 = vmatpush2.bf16.msra.mxu0 0
    %145 = vmatprep.subr.bf16.mxu0 0
    %146 = vmatpush2.bf16.msra.mxu0 0
    %147 = vmatprep.subr.bf16.mxu0 0
    %148 = vmatpush2.bf16.msra.mxu0 0
    %149 = vmatprep.mubr.bf16.mxu0 0
    %150 = vmatmul.mubr.bf16.gmra.mxu0 %v59
    %v151 = vpop.f32.mrf.mxu0
    %v152 = vadd.f32 0.0, %v151
    %v153 = vpop.f32.mrf.mxu0
    %v154 = vpop.f32.mrf.mxu0
    %v155 = vadd.f32 0.0, %v154
    %v156 = vpop.f32.mrf.mxu0
    %157 = vmatprep.mubr.bf16.mxu0 0
    %158 = vmatmul.mubr.bf16.gmra.mxu0 %v60
    %v159 = vpop.f32.mrf.mxu0
    %v160 = vadd.f32 0.0, %v159
    %v161 = vpop.f32.mrf.mxu0
    %v162 = vpop.f32.mrf.mxu0
    %v163 = vadd.f32 0.0, %v162
    %v164 = vpop.f32.mrf.mxu0
    %165 = vmatprep.mubr.bf16.mxu0 0
    %166 = vmatmul.mubr.bf16.gmra.mxu0 %v61
    %v167 = vpop.f32.mrf.mxu0
    %v168 = vadd.f32 0.0, %v167
    %v169 = vpop.f32.mrf.mxu0
    %v170 = vpop.f32.mrf.mxu0
    %v171 = vadd.f32 0.0, %v170
    %v172 = vpop.f32.mrf.mxu0
    %173 = vmatprep.mubr.bf16.mxu0 0
    %174 = vmatmul.mubr.bf16.gmra.mxu0 %v62
    %v175 = vpop.f32.mrf.mxu0
    %v176 = vadd.f32 0.0, %v175
    %v177 = vpop.f32.mrf.mxu0
    %v178 = vpop.f32.mrf.mxu0
    %v179 = vadd.f32 0.0, %v178
    %v180 = vpop.f32.mrf.mxu0
    %181 = vmatprep.mubr.bf16.mxu0 0
    %182 = vmatmul.mubr.bf16.gmra.mxu0 %v63
    %v183 = vpop.f32.mrf.mxu0
    %v184 = vadd.f32 0.0, %v183
    %v185 = vpop.f32.mrf.mxu0
    %v186 = vpop.f32.mrf.mxu0
    %v187 = vadd.f32 0.0, %v186
    %v188 = vpop.f32.mrf.mxu0
    %189 = vdwg.mxu0
    %v190 = vmul.f32 %v152, 0.088388346
    %v191 = vmul.f32 %v155, 0.088388346
    %v192 = vmul.f32 %v160, 0.088388346
    %v193 = vmul.f32 %v163, 0.088388346
    %v194 = vmul.f32 %v168, 0.088388346
    %v195 = vmul.f32 %v171, 0.088388346
    %v196 = vmul.f32 %v176, 0.088388346
    %v197 = vmul.f32 %v179, 0.088388346
    %v198 = vmul.f32 %v184, 0.088388346
    %v199 = vmul.f32 %v187, 0.088388346
    %v200 = vsub.f32 0.0, %v190
    %v201 = vsub.f32 0.0, %v191
    %v202 = vsub.f32 0.0, %v192
    %v203 = vsub.f32 0.0, %v193
    %v204 = vsub.f32 0.0, %v194
    %v205 = vsub.f32 0.0, %v195
    %v206 = vsub.f32 0.0, %v196
    %v207 = vsub.f32 0.0, %v197
    %v208 = vsub.f32 0.0, %v198
    %v209 = vsub.f32 0.0, %v199
    %v210 = vmul.f32 %v200, 1.442695
    %v211 = vpow.pop %v210
    %v212 = vmul.f32 %v201, 1.442695
    %v213 = vpow.pop %v212
    %v214 = vmul.f32 %v202, 1.442695
    %v215 = vpow.pop %v214
    %v216 = vmul.f32 %v203, 1.442695
    %v217 = vpow.pop %v216
    %v218 = vmul.f32 %v204, 1.442695
    %v219 = vpow.pop %v218
    %v220 = vmul.f32 %v205, 1.442695
    %v221 = vpow.pop %v220
    %v222 = vmul.f32 %v206, 1.442695
    %v223 = vpow.pop %v222
    %v224 = vmul.f32 %v207, 1.442695
    %v225 = vpow.pop %v224
    %v226 = vmul.f32 %v208, 1.442695
    %v227 = vpow.pop %v226
    %v228 = vmul.f32 %v209, 1.442695
    %v229 = vpow.pop %v228
    %v230 = vadd.f32 %v211, 1.0
    %v231 = vadd.f32 %v213, 1.0
    %v232 = vadd.f32 %v215, 1.0
    %v233 = vadd.f32 %v217, 1.0
    %v234 = vadd.f32 %v219, 1.0
    %v235 = vadd.f32 %v221, 1.0
    %v236 = vadd.f32 %v223, 1.0
    %v237 = vadd.f32 %v225, 1.0
    %v238 = vadd.f32 %v227, 1.0
    %v239 = vadd.f32 %v229, 1.0
    %v240 = vrcp.pop %v230
    %v241 = vrcp.pop %v231
    %v242 = vrcp.pop %v232
    %v243 = vrcp.pop %v233
    %v244 = vrcp.pop %v234
    %v245 = vrcp.pop %v235
    %v246 = vrcp.pop %v236
    %v247 = vrcp.pop %v237
    %v248 = vrcp.pop %v238
    %v249 = vrcp.pop %v239
    %v250 = vmul.f32 %v190, 1.6763934
    %v251 = vmul.f32 %v191, 1.6763934
    %v252 = vmul.f32 %v192, 1.6763934
    %v253 = vmul.f32 %v193, 1.6763934
    %v254 = vmul.f32 %v194, 1.6763934
    %v255 = vmul.f32 %v195, 1.6763934
    %v256 = vmul.f32 %v196, 1.6763934
    %v257 = vmul.f32 %v197, 1.6763934
    %v258 = vmul.f32 %v198, 1.6763934
    %v259 = vmul.f32 %v199, 1.6763934
    %v260 = vmul.f32 %v250, %v240
    %v261 = vmul.f32 %v251, %v241
    %v262 = vmul.f32 %v252, %v242
    %v263 = vmul.f32 %v253, %v243
    %v264 = vmul.f32 %v254, %v244
    %v265 = vmul.f32 %v255, %v245
    %v266 = vmul.f32 %v256, %v246
    %v267 = vmul.f32 %v257, %v247
    %v268 = vmul.f32 %v258, %v248
    %v269 = vmul.f32 %v259, %v249
    %270 = vst [vmem:[#allocation2] sm:$0xff] %v260
    %271 = vst [vmem:[#allocation2 + $0x8] sm:$0xff] %v261
    %272 = vst [vmem:[#allocation2 + $0x10] sm:$0xff] %v262
    %273 = vst [vmem:[#allocation2 + $0x18] sm:$0xff] %v263
    %274 = vst [vmem:[#allocation2 + $0x20] sm:$0xff] %v264
    %275 = vst [vmem:[#allocation2 + $0x28] sm:$0xff] %v265
    %276 = vst [vmem:[#allocation2 + $0x30] sm:$0xff] %v266
    %277 = vst [vmem:[#allocation2 + $0x38] sm:$0xff] %v267
    %278 = vst [vmem:[#allocation2 + $0x40] sm:$0xff] %v268
    %279 = vst [vmem:[#allocation2 + $0x48] sm:$0xff] %v269
    // Predicated region
    $region10: #{energy_layer_forward.1} parent=1 // pred_check
      _
    $region11: #{energy_layer_forward.1} parent=1 // pred_check_branch
      %281 = sbr.rel (0) target = $region13
    $region12: #{energy_layer_forward.1} parent=1 // pred_region
      %s283 = ssub.s32 1280, 1280
      %284 = vsyncadd [#allocation3], %s283
      %s285 = sshll.u32 [#allocation2], 4
      %s286 = int_to_ptr.vmem [resolvable:$true] %s285
      %291 = dma.vmem_to_hbm [thread:$0]  %s286, 1280, %s2, [#allocation3], 128, 128, 8
    $region13: #{energy_layer_forward.1} parent=1 // pred_fallthru
      _
    // Predicated region
    $region14: #{energy_layer_forward.1} parent=1 // pred_check
      _
    $region15: #{energy_layer_forward.1} parent=1 // pred_check_branch
      %293 = sbr.rel (0) target = $region17
    $region16: #{energy_layer_forward.1} parent=1 // pred_region
      %294 = dma.done [#allocation3], 1280
    $region17: #{energy_layer_forward.1} parent=1 // pred_fallthru
      _
    %295 = vsyncpa [#allocation3], 1

</llo_original>
